<compile_context>
chip_gen: v6e
topology: v6e:2x2x1
jax: 0.10.0
libtpu: 0.0.40
codegen_flags: <defaults>
</compile_context>

<pallas_src>
import jax
import jax.numpy as jnp
from jax.experimental import pallas as pl
from jax.experimental.pallas import tpu as pltpu

_LANE = 128
_SUBLANE = 8
_MAX_TILE_BYTES = 3 * 1024 * 1024        # per pipelined buffer
_VMEM_LIMIT_BYTES = 32 * 1024 * 1024     # explicit scoped-VMEM limit


def _cdiv(a, b):
    return -(-a // b)


def _round_up(a, m):
    return _cdiv(a, m) * m


def _num_tensorcores_per_chip():
    # v7x has 2 TensorCores per chip; v5e/v6e have 1. Fallback to 1 if unknown.
    try:
        kind = jax.devices()[0].device_kind.lower()
    except Exception:
        return 1
    return 2 if ("v7" in kind or "7x" in kind) else 1


def _ssb_kernel(w_ref, b_ref, x_ref, o_ref):
    # w_ref / b_ref: scalar-prefetch SMEM refs, shape (1,), float32.
    # x_ref / o_ref: VMEM tiles of shape (tm, width).
    x = x_ref[...].astype(jnp.float32)            # FMA in f32: HBM-bound, VPU has slack
    o_ref[...] = (x * w_ref[0] + b_ref[0]).astype(o_ref.dtype)


def _tile_rows(rows, width, itemsize, sub, num_tc):
    """Pick the row-tile size (multiple of the packed sublane count `sub`)."""
    tm_cap = max(sub, (_MAX_TILE_BYTES // (width * itemsize)) // sub * sub)
    if num_tc >= 2:
        # v7x: guarantee an even number of near-equal blocks (>= 64 rows each) so the
        # "parallel" grid axis shards evenly across both TensorCores.
        min_rows = max(sub, 64)
        if rows >= 2 * min_rows:
            g = max(2, _cdiv(rows, tm_cap))
            if g % 2:
                g += 1
            return min(tm_cap, max(sub, _round_up(_cdiv(rows, g), sub)))
    if rows <= tm_cap:
        return rows                               # single block == full dim (legal)
    return tm_cap                                 # biggest tile; Pallas masks last block


def _ssb_2d(x2d, w, b):
    rows, width = x2d.shape
    dtype = x2d.dtype
    itemsize = jnp.dtype(dtype).itemsize
    sub = _SUBLANE * max(1, 4 // itemsize)        # 8 f32 / 16 bf16 / 32 int8
    tm = _tile_rows(rows, width, itemsize, sub, _num_tensorcores_per_chip())
    grid = (_cdiv(rows, tm),)

    return pl.pallas_call(
        _ssb_kernel,
        out_shape=jax.ShapeDtypeStruct((rows, width), dtype),
        grid_spec=pltpu.PrefetchScalarGridSpec(
            num_scalar_prefetch=2,
            grid=grid,
            in_specs=[pl.BlockSpec((tm, width), lambda i, w_r, b_r: (i, 0))],
            out_specs=pl.BlockSpec((tm, width), lambda i, w_r, b_r: (i, 0)),
        ),
        compiler_params=pltpu.CompilerParams(
            dimension_semantics=("parallel",),
            vmem_limit_bytes=_VMEM_LIMIT_BYTES,
        ),
    )(w, b, x2d)


def scalar_scale_bias(x, weight=None, bias=None):
    """y = x * weight + bias (scalar weight/bias broadcast over x), Pallas TPU kernel.

    weight / bias: shape-(1,) arrays (matching Parameter(torch.Tensor(1))) or None
    (matching scale=False / bias=False in the PyTorch module).
    """
    if weight is None and bias is None:
        return x                                   # identity config: no HBM traffic
    orig_shape = x.shape
    dtype = x.dtype
    n = x.size
    if n == 0:
        return x

    w = (jnp.ones((1,), jnp.float32) if weight is None
         else jnp.asarray(weight).reshape(1).astype(jnp.float32))
    b = (jnp.zeros((1,), jnp.float32) if bias is None
         else jnp.asarray(bias).reshape(1).astype(jnp.float32))

    flat = x.reshape(-1)

    # Widest lane-dense 2D view that divides n exactly -> no pad, no slice, 1x traffic.
    width = None
    for cand in (1024, 512, 256, _LANE):
        if n % cand == 0:
            width = cand
            break
    if width is not None:
        return _ssb_2d(flat.reshape(n // width, width), w, b).reshape(orig_shape)

    # Ragged tail (n % 128 != 0): kernel on the 128-aligned prefix, plain jnp on the
    # <128-element tail, stitched.  No whole-tensor pad/slice.
    n_main = (n // _LANE) * _LANE
    tail_out = (flat[n_main:].astype(jnp.float32) * w[0] + b[0]).astype(dtype)
    if n_main == 0:
        return tail_out.reshape(orig_shape)
    main_out = _ssb_2d(flat[:n_main].reshape(n_main // _LANE, _LANE), w, b).reshape(-1)
    return jnp.concatenate([main_out, tail_out]).reshape(orig_shape)


if __name__ == "__main__":
    # Deterministic parameter init (mirrors reset_parameters with constant init).
    scale_init = 1.5
    bias_init = 0.25
    weight = jnp.full((1,), scale_init, dtype=jnp.float32)  # Parameter(torch.Tensor(1))
    bias = jnp.full((1,), bias_init, dtype=jnp.float32)     # Parameter(torch.Tensor(1))

    key = jax.random.PRNGKey(0)
    k0, k1, k2, k3 = jax.random.split(key, 4)

    # Small NCHW input, as the module would typically see from a conv stack.
    x = jax.random.normal(k0, (2, 4, 16, 16), dtype=jnp.float32)
    y = jax.block_until_ready(scalar_scale_bias(x, weight, bias))
    assert y.shape == x.shape and y.dtype == x.dtype
    assert jnp.allclose(y, x * weight[0] + bias[0], atol=1e-6, rtol=1e-6)

    # Ragged-tail fallback path (n % 128 != 0).
    x2 = jax.random.normal(k1, (3, 5, 7), dtype=jnp.float32)
    y2 = jax.block_until_ready(scalar_scale_bias(x2, weight, bias))
    assert jnp.allclose(y2, x2 * weight[0] + bias[0], atol=1e-6, rtol=1e-6)

    # Multi-block / TC-split path on a slightly larger tensor.
    x3 = jax.random.normal(k2, (2, 256, 256), dtype=jnp.float32)
    y3 = jax.block_until_ready(scalar_scale_bias(x3, weight, bias))
    assert jnp.allclose(y3, x3 * weight[0] + bias[0], atol=1e-6, rtol=1e-6)

    # bf16 input: FMA in f32, store in bf16; dtype-aware sublane rounding path.
    x4 = jax.random.normal(k3, (4, 8, 32), dtype=jnp.bfloat16)
    y4 = jax.block_until_ready(scalar_scale_bias(x4, weight, bias))
    ref4 = (x4.astype(jnp.float32) * weight[0] + bias[0]).astype(jnp.bfloat16)
    assert y4.dtype == jnp.bfloat16
    assert jnp.allclose(y4.astype(jnp.float32), ref4.astype(jnp.float32),
                        atol=1e-2, rtol=1e-2)

    # scale=False / bias=False -> identity, no kernel launch.
    y5 = scalar_scale_bias(x)
    assert y5 is x

    print("KERNEL_OK")
</pallas_src>

<mosaic_0001>
module attributes {stable_mosaic.version = 11 : i64} {
  func.func @_ssb_kernel(%arg0: i32, %arg1: memref<1xf32, #tpu.memory_space<smem>>, %arg2: memref<1xf32, #tpu.memory_space<smem>>, %arg3: memref<2x1024xf32, #tpu.memory_space<vmem>>, %arg4: memref<2x1024xf32, #tpu.memory_space<vmem>>) attributes {dimension_semantics = [#tpu.dimension_semantics<parallel>], iteration_bounds = array<i64: 1>, scalar_prefetch = 2 : i64, scratch_operands = 0 : i64, tpu.core_type = #tpu.core_type<tc>, window_params = [{transform_indices = @transform_0, window_bounds = array<i64: 2, 1024>}, {transform_indices = @transform_1, window_bounds = array<i64: 2, 1024>}]} {
    %c0 = arith.constant 0 : index
    %c0_0 = arith.constant 0 : index
    %0 = vector.load %arg3[%c0, %c0_0] : memref<2x1024xf32, #tpu.memory_space<vmem>>, vector<2x1024xf32>
    %c0_1 = arith.constant 0 : index
    %1 = memref.load %arg1[%c0_1] : memref<1xf32, #tpu.memory_space<smem>>
    %2 = vector.broadcast %1 : f32 to vector<2x1024xf32>
    %3 = arith.mulf %0, %2 : vector<2x1024xf32>
    %c0_2 = arith.constant 0 : index
    %4 = memref.load %arg2[%c0_2] : memref<1xf32, #tpu.memory_space<smem>>
    %5 = vector.broadcast %4 : f32 to vector<2x1024xf32>
    %6 = arith.addf %3, %5 : vector<2x1024xf32>
    %c0_3 = arith.constant 0 : index
    %c0_4 = arith.constant 0 : index
    %7 = vector.load %arg4[%c0_3, %c0_4] : memref<2x1024xf32, #tpu.memory_space<vmem>>, vector<2x1024xf32>
    tpu.vector_store %arg4[%c0_3, %c0_4], %6 {strides = array<i32>} : memref<2x1024xf32, #tpu.memory_space<vmem>>, vector<2x1024xf32>,
    return
  }
  func.func @transform_0(%arg0: i32, %arg1: memref<1xf32, #tpu.memory_space<smem>>, %arg2: memref<1xf32, #tpu.memory_space<smem>>) -> (i32, i32) {
    %c0_i32 = arith.constant 0 : i32
    %c0_i32_0 = arith.constant 0 : i32
    return %arg0, %c0_i32 : i32, i32
  }
  func.func @transform_1(%arg0: i32, %arg1: memref<1xf32, #tpu.memory_space<smem>>, %arg2: memref<1xf32, #tpu.memory_space<smem>>) -> (i32, i32) {
    %c0_i32 = arith.constant 0 : i32
    %c0_i32_0 = arith.constant 0 : i32
    return %arg0, %c0_i32 : i32, i32
  }
}

</mosaic_0001>

<llo_original>
// kernel: tpu_custom_call.1
$region0: #{tpu_custom_call.1}
  #allocation0 [shape = 'u32[]', space=smem, size = 0x4, offset = 0x4, fixed_abs, tag = 'smem constant byte address 0x4 - core index']
  #allocation1 [shape = 'u32[144,128]{1,0:T(1,128)}', space=vmem, size = 0x12000, scoped, tag = 'internal scratch']
  #allocation2 [shape = 's32[1]{0}', space=sflag, size = 0x4, scoped, tag = 'scoped memory for tpu_custom_call.1']
  #allocation3 [shape = 'f32[1]{0:T(128)S(6)}', space=smem, size = 0x200, scoped, tag = 'prefetched SMEM operand 0']
  #allocation4 [shape = 'f32[1]{0:T(128)S(6)}', space=smem, size = 0x200, scoped, tag = 'prefetched SMEM operand 1']
  %s0 = inlined_call_operand.<no memory space> [shape: f32[1], index: 0, kind: input, shape index: {}]
  %s1 = inlined_call_operand.<no memory space> [shape: f32[1], index: 1, kind: input, shape index: {}]
  %s2 = inlined_call_operand.hbm [shape: f32[2,1024], index: 2, kind: input, shape index: {}]
  %s3 = inlined_call_operand.hbm [shape: f32[2,1024], index: 3, kind: output, shape index: {}]
  %s4 = sld [smem:[#allocation0]]
  $region18: #{tpu_custom_call.1} parent=0
    _
  %s6 = ssub.s32 1, %s4
  %s7 = scalar_select 0, %s6, %s4
  %8 = sst [smem:[#allocation3]] %s0
  %9 = sst [smem:[#allocation4]] %s1
  $region1: #{tpu_custom_call.1} parent=0
    #allocation5 [shape = 'u8[8192]{0}', space=vmem, size = 0x2000, scoped, tag = 'input window, operand 2, single buffered']
    #allocation6 [shape = 's32[1]{0}', space=sflag, size = 0x4, scoped, tag = 'scoped memory for tpu_custom_call.1']
    #allocation7 [shape = 's32[1]{0}', space=sflag, size = 0x4, scoped, tag = 'scoped memory for tpu_custom_call.1']
    #allocation8 [shape = 'u8[8192]{0}', space=vmem, size = 0x2000, scoped, tag = 'output window, operand 0, single buffered']
    %10 = vsyncpa [#allocation6], 0
    %11 = vsyncpa [#allocation7], 0
    // Predicated region
    $region2: #{tpu_custom_call.1} parent=1 // pred_check
      _
    $region3: #{tpu_custom_call.1} parent=1 // pred_check_branch
      %13 = sbr.rel (0) target = $region5
    $region4: #{tpu_custom_call.1} parent=1 // pred_region
      %s15 = ssub.s32 256, 256
      %16 = vsyncadd [#allocation6], %s15
      %s18 = sshll.u32 [#allocation5], 4
      %s19 = int_to_ptr.vmem [resolvable:$true] %s18
      %21 = dma.hbm_to_vmem [thread:$0]  %s2, 256, %s19, [#allocation6]
    $region5: #{tpu_custom_call.1} parent=1 // pred_fallthru
      _
    // Predicated region
    $region6: #{tpu_custom_call.1} parent=1 // pred_check
      _
    $region7: #{tpu_custom_call.1} parent=1 // pred_check_branch
      %23 = sbr.rel (0) target = $region9
    $region8: #{tpu_custom_call.1} parent=1 // pred_region
      %24 = dma.done [#allocation6], 256
    $region9: #{tpu_custom_call.1} parent=1 // pred_fallthru
      _
    %v25 = vld [vmem:[#allocation5] sm:$0xff]
    %v26 = vld [vmem:[#allocation5 + $0x8] sm:$0xff]
    %s27 = sld [smem:[#allocation3]]
    %v28 = vstv %s27
    %v29 = vmul.f32 %v25, %v28
    %v30 = vmul.f32 %v26, %v28
    %s31 = sld [smem:[#allocation4]]
    %v32 = vstv %s31
    %v33 = vadd.f32 %v29, %v32
    %v34 = vadd.f32 %v30, %v32
    %35 = vst [vmem:[#allocation8] sm:$0xff] %v33
    %36 = vst [vmem:[#allocation8 + $0x8] sm:$0xff] %v34
    // Predicated region
    $region10: #{tpu_custom_call.1} parent=1 // pred_check
      _
    $region11: #{tpu_custom_call.1} parent=1 // pred_check_branch
      %38 = sbr.rel (0) target = $region13
    $region12: #{tpu_custom_call.1} parent=1 // pred_region
      %s40 = ssub.s32 256, 256
      %41 = vsyncadd [#allocation7], %s40
      %s43 = sshll.u32 [#allocation8], 4
      %s44 = int_to_ptr.vmem [resolvable:$true] %s43
      %46 = dma.vmem_to_hbm [thread:$0]  %s44, 256, %s3, [#allocation7]
    $region13: #{tpu_custom_call.1} parent=1 // pred_fallthru
      _
    // Predicated region
    $region14: #{tpu_custom_call.1} parent=1 // pred_check
      _
    $region15: #{tpu_custom_call.1} parent=1 // pred_check_branch
      %48 = sbr.rel (0) target = $region17
    $region16: #{tpu_custom_call.1} parent=1 // pred_region
      %49 = dma.done [#allocation7], 256
    $region17: #{tpu_custom_call.1} parent=1 // pred_fallthru
      _
    %50 = vsyncpa [#allocation6], 1
    %51 = vsyncpa [#allocation7], 1

</llo_original>
